<compile_context>
chip_gen: v7x
topology: tpu7x:2x2x1
jax: 0.10.0
libtpu: 0.0.40
codegen_flags: <defaults>
</compile_context>

<pallas_src>
import functools

import jax
import jax.numpy as jnp
from jax.experimental import pallas as pl
from jax.experimental.pallas import tpu as pltpu


def _class_head_kernel(x_ref, w_ref, b_ref, o_ref, *, compute_dtype):
    # x_ref: (C, t)    native-dtype pixel tile, pixels on the lane axis
    # w_ref: (A2p, C)  resident across the whole grid (constant index_map)
    # b_ref: (A2p, 1)  f32, resident
    # o_ref: (A2p, t)  lane-dense stores
    x = x_ref[...].astype(compute_dtype)          # in-kernel cast: no extra HBM pass
    acc = jnp.dot(w_ref[...], x, preferred_element_type=jnp.float32)
    o_ref[...] = (acc + b_ref[...]).astype(o_ref.dtype)


def _pick_pixel_tile(HW, N, t_pix):
    """Balanced, 128-lane-aligned pixel tile; >=2 tiles when N==1 (v7x occupancy)."""
    if HW <= 128:
        return HW                                  # full extent, single tile
    n_tiles = -(-HW // int(t_pix))
    if N == 1 and n_tiles < 2:
        n_tiles = 2                                # keep both v7x TensorCores busy
    t = -(-HW // n_tiles)
    t = ((t + 127) // 128) * 128                   # lane-aligned block
    if t >= HW:
        return HW
    return t


def class_head_forward(x_nchw, weight, bias, num_anchors=3, *, t_pix=2048,
                       compute_dtype=jnp.bfloat16, out_dtype=jnp.bfloat16):
    """RetinaFace ClassHead forward.

    x_nchw : (N, C, H, W)              activation, native PyTorch NCHW layout
    weight : (A2, C) or (A2, C, 1, 1)  PyTorch Conv2d 1x1 weight (out_ch, in_ch)
    bias   : (A2,)
    returns: (N, H*W*num_anchors, 2) in `out_dtype` (bf16 by default; pass
             out_dtype=x_nchw.dtype for PyTorch-matching output dtype).
    """
    N, C, H, W = x_nchw.shape
    weight = weight.reshape(weight.shape[0], C)    # (A2, C)
    A2 = weight.shape[0]
    assert A2 == num_anchors * 2

    HW = H * W

    # ---- layout plumbing (copy-free on the big tensor) ---------------------
    x = x_nchw.reshape(N, C, HW)                   # contiguous reshape, no movement

    # Pad the A2 (=6) output channels up to 8 sublanes -> aligned output tile.
    A2p = max(8, ((A2 + 7) // 8) * 8)
    w_p = jnp.zeros((A2p, C), compute_dtype).at[:A2].set(weight.astype(compute_dtype))
    b_p = jnp.zeros((A2p, 1), jnp.float32).at[:A2, 0].set(bias.astype(jnp.float32))

    # Pixel tile + grid (ragged tail -> partial last block, no divisibility assert).
    t = _pick_pixel_tile(HW, N, t_pix)
    grid = (N, pl.cdiv(HW, t))

    # Explicit VMEM budget with headroom (respects v5e 16 MiB default, v7x 64 MiB).
    in_itemsize = jnp.dtype(x.dtype).itemsize
    out_itemsize = jnp.dtype(out_dtype).itemsize
    vmem_bytes = (2 * C * t * in_itemsize          # double-buffered input tile
                  + 2 * A2p * t * out_itemsize     # double-buffered output tile
                  + A2p * C * jnp.dtype(compute_dtype).itemsize
                  + A2p * 4)
    vmem_limit = int(min(max(2 * vmem_bytes, 16 << 20), 48 << 20))

    cost = pl.CostEstimate(
        flops=2 * N * HW * A2 * C,
        transcendentals=0,
        bytes_accessed=N * HW * (C * in_itemsize + A2p * out_itemsize)
                       + A2p * C * jnp.dtype(compute_dtype).itemsize,
    )

    kernel = functools.partial(_class_head_kernel, compute_dtype=compute_dtype)

    out_padded = pl.pallas_call(
        kernel,
        out_shape=jax.ShapeDtypeStruct((N, A2p, HW), out_dtype),
        grid=grid,
        in_specs=[
            pl.BlockSpec((None, C, t), lambda n, p: (n, 0, p)),   # pixel tile
            pl.BlockSpec((A2p, C), lambda n, p: (0, 0)),          # weight, resident
            pl.BlockSpec((A2p, 1), lambda n, p: (0, 0)),          # bias, resident
        ],
        out_specs=pl.BlockSpec((None, A2p, t), lambda n, p: (n, 0, p)),
        compiler_params=pltpu.CompilerParams(
            dimension_semantics=("parallel", "parallel"),
            vmem_limit_bytes=vmem_limit,
        ),
        cost_estimate=cost,
    )(x, w_p, b_p)

    # Tiny output-side glue: (N, A2p, HW) -> (N, HW, A2) -> (N, HW*A, 2).
    out = jnp.transpose(out_padded[:, :A2, :], (0, 2, 1))
    return out.reshape(N, HW * num_anchors, 2)


if __name__ == "__main__":
    # Small shapes consistent with the module (channels scaled down).
    N, C, H, W = 2, 64, 16, 16
    num_anchors = 3
    A2 = num_anchors * 2

    key = jax.random.PRNGKey(0)
    kx, kw, kb = jax.random.split(key, 3)
    x = jax.random.normal(kx, (N, C, H, W), dtype=jnp.float32)
    # PyTorch Conv2d(C, A2, kernel=1) weight layout: (out_ch, in_ch, 1, 1).
    weight = jax.random.normal(kw, (A2, C, 1, 1), dtype=jnp.float32) * 0.05
    bias = jax.random.normal(kb, (A2,), dtype=jnp.float32) * 0.05

    # t_pix=128 so the small test exercises a multi-step (2x2) grid.
    out = class_head_forward(x, weight, bias, num_anchors=num_anchors, t_pix=128)
    out = jax.block_until_ready(out)
    assert out.shape == (N, H * W * num_anchors, 2)

    # Pure-JAX reference with identical bf16-input / f32-accumulate math.
    xb = x.astype(jnp.bfloat16).transpose(0, 2, 3, 1).reshape(-1, C)
    wb = weight.reshape(A2, C).astype(jnp.bfloat16)
    ref = (jnp.dot(xb, wb.T, preferred_element_type=jnp.float32) + bias)
    ref = ref.reshape(N, -1, 2).astype(out.dtype)
    assert jnp.allclose(out.astype(jnp.float32), ref.astype(jnp.float32),
                        atol=2e-2, rtol=2e-2), \
        float(jnp.max(jnp.abs(out.astype(jnp.float32) - ref.astype(jnp.float32))))

    print("KERNEL_OK")
</pallas_src>

<mosaic_0001>
module attributes {stable_mosaic.version = 11 : i64} {
  func.func @_class_head_kernel(%arg0: i32, %arg1: i32, %arg2: memref<1x64x128xf32, #tpu.memory_space<vmem>>, %arg3: memref<8x64xbf16, #tpu.memory_space<vmem>>, %arg4: memref<8x1xf32, #tpu.memory_space<vmem>>, %arg5: memref<1x8x128xbf16, #tpu.memory_space<vmem>>) attributes {dimension_semantics = [#tpu.dimension_semantics<parallel>, #tpu.dimension_semantics<parallel>], iteration_bounds = array<i64: 2, 2>, scalar_prefetch = 0 : i64, scratch_operands = 0 : i64, tpu.core_type = #tpu.core_type<tc>, window_params = [{transform_indices = @transform_0, window_bounds = array<i64: 1, 64, 128>}, {pipeline_mode = #tpu.pipeline_mode<synchronous>, transform_indices = @transform_1, window_bounds = array<i64: 8, 64>}, {pipeline_mode = #tpu.pipeline_mode<synchronous>, transform_indices = @transform_2, window_bounds = array<i64: 8, 1>}, {transform_indices = @transform_3, window_bounds = array<i64: 1, 8, 128>}]} {
    %c0 = arith.constant 0 : index
    %c0_0 = arith.constant 0 : index
    %c0_1 = arith.constant 0 : index
    %0 = vector.load %arg2[%c0, %c0_0, %c0_1] : memref<1x64x128xf32, #tpu.memory_space<vmem>>, vector<1x64x128xf32>
    %1 = vector.shape_cast %0 : vector<1x64x128xf32> to vector<64x128xf32>
    %2 = arith.truncf %1 : vector<64x128xf32> to vector<64x128xbf16>
    %c0_2 = arith.constant 0 : index
    %c0_3 = arith.constant 0 : index
    %3 = vector.load %arg3[%c0_2, %c0_3] : memref<8x64xbf16, #tpu.memory_space<vmem>>, vector<8x64xbf16>
    %cst = arith.constant dense<0.000000e+00> : vector<8x128xf32>
    %4 = tpu.matmul %3, %2, %cst {dimension_numbers = #tpu.dot_dimension_numbers<[1], [0], [0], [1], [0, 0, 1, 1], [], []>} : vector<8x64xbf16>, vector<64x128xbf16>, vector<8x128xf32> -> vector<8x128xf32>
    %c0_4 = arith.constant 0 : index
    %c0_5 = arith.constant 0 : index
    %5 = vector.load %arg4[%c0_4, %c0_5] : memref<8x1xf32, #tpu.memory_space<vmem>>, vector<8x1xf32>
    %6 = vector.broadcast %5 : vector<8x1xf32> to vector<8x128xf32>
    %7 = arith.addf %4, %6 : vector<8x128xf32>
    %8 = arith.truncf %7 : vector<8x128xf32> to vector<8x128xbf16>
    %c0_6 = arith.constant 0 : index
    %c0_7 = arith.constant 0 : index
    %c0_8 = arith.constant 0 : index
    %9 = vector.load %arg5[%c0_6, %c0_7, %c0_8] : memref<1x8x128xbf16, #tpu.memory_space<vmem>>, vector<1x8x128xbf16>
    %10 = vector.shape_cast %9 : vector<1x8x128xbf16> to vector<8x128xbf16>
    %11 = vector.shape_cast %8 : vector<8x128xbf16> to vector<1x8x128xbf16>
    tpu.vector_store %arg5[%c0_6, %c0_7, %c0_8], %11 {strides = array<i32>} : memref<1x8x128xbf16, #tpu.memory_space<vmem>>, vector<1x8x128xbf16>,
    return
  }
  func.func @transform_0(%arg0: i32, %arg1: i32) -> (i32, i32, i32) {
    %c0_i32 = arith.constant 0 : i32
    %c0_i32_0 = arith.constant 0 : i32
    return %arg0, %c0_i32, %arg1 : i32, i32, i32
  }
  func.func @transform_1(%arg0: i32, %arg1: i32) -> (i32, i32) {
    %c0_i32 = arith.constant 0 : i32
    %c0_i32_0 = arith.constant 0 : i32
    %c0_i32_1 = arith.constant 0 : i32
    return %c0_i32, %c0_i32_0 : i32, i32
  }
  func.func @transform_2(%arg0: i32, %arg1: i32) -> (i32, i32) {
    %c0_i32 = arith.constant 0 : i32
    %c0_i32_0 = arith.constant 0 : i32
    %c0_i32_1 = arith.constant 0 : i32
    return %c0_i32, %c0_i32_0 : i32, i32
  }
  func.func @transform_3(%arg0: i32, %arg1: i32) -> (i32, i32, i32) {
    %c0_i32 = arith.constant 0 : i32
    %c0_i32_0 = arith.constant 0 : i32
    return %arg0, %c0_i32, %arg1 : i32, i32, i32
  }
}

</mosaic_0001>

<llo_original>
// kernel: tpu_custom_call.1
$region0: #{tpu_custom_call.1}
  #allocation0 [shape = 'u32[]', space=smem, size = 0x4, offset = 0x4, fixed_abs, tag = 'smem constant byte address 0x4 - core index']
  #allocation1 [shape = 'u32[144,128]{1,0:T(1,128)}', space=vmem, size = 0x12000, scoped, tag = 'internal scratch']
  %s0 = inlined_call_operand.hbm [shape: f32[2,64,256], index: 0, kind: input, shape index: {}]
  %s1 = inlined_call_operand.vmem [shape: bf16[8,64], index: 1, kind: input, shape index: {}]
  %s2 = inlined_call_operand.vmem [shape: f32[8,1], index: 2, kind: input, shape index: {}]
  %s3 = inlined_call_operand.hbm [shape: bf16[2,8,256], index: 3, kind: output, shape index: {}]
  %s4 = sld [smem:[#allocation0]]
  $region49: #{tpu_custom_call.1} parent=0
    _
  %s6 = ssub.s32 1, %s4
  %s7 = scalar_select 0, %s6, %s4
  $region1: #{tpu_custom_call.1} parent=0
    #allocation2 [shape = 'u8[65536]{0}', space=vmem, size = 0x10000, scoped, tag = 'input window, operand 0']
    #allocation3 [shape = 's32[2]{0}', space=sflag, size = 0x8, scoped, tag = 'scoped memory for tpu_custom_call.1']
    #allocation4 [shape = 's32[2]{0}', space=sflag, size = 0x8, scoped, tag = 'scoped memory for tpu_custom_call.1']
    #allocation5 [shape = 'u8[4096]{0}', space=vmem, size = 0x1000, scoped, tag = 'output window, operand 0']
    %8 = vsyncpa [#allocation3], 0
    %s9 = scalar_lea.sflag [#allocation3], 1
    %10 = vsyncpa %s9, 0
    %11 = vsyncpa [#allocation4], 0
    %s12 = scalar_lea.sflag [#allocation4], 1
    %13 = vsyncpa %s12, 0
    loop: start=0, step=1, limit=6
    $region2: #{tpu_custom_call.1} parent=1 // loop_pre_header
      _
    $region3: #{tpu_custom_call.1} parent=1 // loop_header
      %s15 = sphi 0, %s19
      %p16 = scmp.ge.s32.totalorder %s15, 6
      %s22 = sphi 0, %s34
      %s23 = sphi 0, %s30
      %s24 = sphi 0, %s22
      %s25 = sphi 0, %s23
      %s26 = sphi 0, %s24
      %s27 = sphi 0, %s25
      %s39 = sphi 0, %s41
      %s42 = sphi 0, %s39
      %s43 = sphi 0, %s42
      %s59 = sphi 0, %s43
      %s63 = sphi 0, %s63
      %s65 = sphi 0, %s63
      %s66 = sphi 0, %s65
      %s80 = sphi 0, %s66
      %s84 = sphi 0, %s84
      %s86 = sphi 0, %s84
      %s87 = sphi 0, %s86
      %s101 = sphi 0, %s87
      %s109 = sphi 0, %s111
      %s112 = sphi 0, %s109
      %s113 = sphi 0, %s112
      %s129 = sphi 0, %s113
    $region4: #{tpu_custom_call.1} parent=1 // loop_header_branch
      %18 = sbr.rel (%p16) target = $region8
    $region5: #{tpu_custom_call.1} parent=1 // loop_body
      %s20 = ssub.s32 %s15, 1
      %s21 = ssub.s32 %s15, 2
      %s28 = sadd.s32 1, %s23
      %p29 = scmp.ge.s32.totalorder %s28, 2
      %s30 = scalar_select %p29, 0, %s28
      %s31 = sadd.s32 1, %s22
      %s32 = scalar_select %p29, %s31, %s22
      %p33 = scmp.ge.s32.totalorder %s32, 2
      %s34 = scalar_select %p33, 0, %s32
      %s35 = ssub.s32 %s22, %s34
      %s36 = ssub.s32 %s23, %s30
      %s37 = sor.u32 %s35, %s36
      %p38 = scmp.eq.s32.totalorder %s37, 0
      %s40 = sadd.s32 %s39, 1
      %s41 = scalar_select %p38, %s39, %s40
      %p44 = pneg %p38
      %p45 = scmp.eq.s32.totalorder %s15, 3
      %p46 = por %p44, %p45
      %p47 = scmp.ne.s32.totalorder %s39, %s42
      %p48 = scmp.eq.s32.totalorder %s15, 0
      %p49 = por %p47, %p48
      %p50 = scmp.ne.s32.totalorder %s39, %s42
      %p51 = scmp.eq.s32.totalorder %s20, 3
      %p52 = por %p50, %p51
      %p53 = scmp.ne.s32.totalorder %s42, %s43
      %p54 = scmp.eq.s32.totalorder %s20, 0
      %p55 = por %p53, %p54
      %p56 = scmp.ne.s32.totalorder %s42, %s43
      %p57 = scmp.eq.s32.totalorder %s21, 3
      %p58 = por %p56, %p57
      %p60 = scmp.ne.s32.totalorder %s43, %s59
      %p61 = scmp.eq.s32.totalorder %s21, 0
      %p62 = por %p60, %p61
      %s64 = sadd.s32 %s63, 1
      %p67 = scmp.eq.s32.totalorder %s15, 3
      %p68 = scmp.ne.s32.totalorder %s63, %s65
      %p69 = scmp.eq.s32.totalorder %s15, 0
      %p70 = por %p68, %p69
      %p71 = scmp.ne.s32.totalorder %s63, %s65
      %p72 = scmp.eq.s32.totalorder %s20, 3
      %p73 = por %p71, %p72
      %p74 = scmp.ne.s32.totalorder %s65, %s66
      %p75 = scmp.eq.s32.totalorder %s20, 0
      %p76 = por %p74, %p75
      %p77 = scmp.ne.s32.totalorder %s65, %s66
      %p78 = scmp.eq.s32.totalorder %s21, 3
      %p79 = por %p77, %p78
      %p81 = scmp.ne.s32.totalorder %s66, %s80
      %p82 = scmp.eq.s32.totalorder %s21, 0
      %p83 = por %p81, %p82
      %s85 = sadd.s32 %s84, 1
      %p88 = scmp.eq.s32.totalorder %s15, 3
      %p89 = scmp.ne.s32.totalorder %s84, %s86
      %p90 = scmp.eq.s32.totalorder %s15, 0
      %p91 = por %p89, %p90
      %p92 = scmp.ne.s32.totalorder %s84, %s86
      %p93 = scmp.eq.s32.totalorder %s20, 3
      %p94 = por %p92, %p93
      %p95 = scmp.ne.s32.totalorder %s86, %s87
      %p96 = scmp.eq.s32.totalorder %s20, 0
      %p97 = por %p95, %p96
      %p98 = scmp.ne.s32.totalorder %s86, %s87
      %p99 = scmp.eq.s32.totalorder %s21, 3
      %p100 = por %p98, %p99
      %p102 = scmp.ne.s32.totalorder %s87, %s101
      %p103 = scmp.eq.s32.totalorder %s21, 0
      %p104 = por %p102, %p103
      %s105 = ssub.s32 %s22, %s34
      %s106 = ssub.s32 %s23, %s30
      %s107 = sor.u32 %s105, %s106
      %p108 = scmp.eq.s32.totalorder %s107, 0
      %s110 = sadd.s32 %s109, 1
      %s111 = scalar_select %p108, %s109, %s110
      %p114 = pneg %p108
      %p115 = scmp.eq.s32.totalorder %s15, 3
      %p116 = por %p114, %p115
      %p117 = scmp.ne.s32.totalorder %s109, %s112
      %p118 = scmp.eq.s32.totalorder %s15, 0
      %p119 = por %p117, %p118
      %p120 = scmp.ne.s32.totalorder %s109, %s112
      %p121 = scmp.eq.s32.totalorder %s20, 3
      %p122 = por %p120, %p121
      %p123 = scmp.ne.s32.totalorder %s112, %s113
      %p124 = scmp.eq.s32.totalorder %s20, 0
      %p125 = por %p123, %p124
      %p126 = scmp.ne.s32.totalorder %s112, %s113
      %p127 = scmp.eq.s32.totalorder %s21, 3
      %p128 = por %p126, %p127
      %p130 = scmp.ne.s32.totalorder %s113, %s129
      %p131 = scmp.eq.s32.totalorder %s21, 0
      %p132 = por %p130, %p131
      %p133 = scmp.le.s32.totalorder 1, %s15
      %p134 = scmp.lt.s32.totalorder %s15, 5
      %p135 = pnand %p133, %p134
      %p136 = pneg %p135
      // Predicated region
      $region9: #{tpu_custom_call.1} parent=5 // pred_check
        _
      $region10: #{tpu_custom_call.1} parent=5 // pred_check_branch
        %138 = sbr.rel (%p135) target = $region12
      $region11: #{tpu_custom_call.1} parent=5 // pred_region
        %s139 = ssub.s32 %s15, 1
        // Predicated region
        $region13: #{tpu_custom_call.1} parent=11 // pred_check
          %p140 = pneg %p76
        $region14: #{tpu_custom_call.1} parent=11 // pred_check_branch
          %142 = sbr.rel (%p140) target = $region16
        $region15: #{tpu_custom_call.1} parent=11 // pred_region
          _
        $region16: #{tpu_custom_call.1} parent=11 // pred_fallthru
          _
        // Predicated region
        $region17: #{tpu_custom_call.1} parent=11 // pred_check
          %p143 = pneg %p97
        $region18: #{tpu_custom_call.1} parent=11 // pred_check_branch
          %145 = sbr.rel (%p143) target = $region20
        $region19: #{tpu_custom_call.1} parent=11 // pred_region
          _
        $region20: #{tpu_custom_call.1} parent=11 // pred_fallthru
          _
      $region12: #{tpu_custom_call.1} parent=5 // pred_fallthru
        _
      %p146 = scmp.lt.s32.totalorder %s15, 4
      // Predicated region
      $region21: #{tpu_custom_call.1} parent=5 // pred_check
        %p147 = pneg %p146
      $region22: #{tpu_custom_call.1} parent=5 // pred_check_branch
        %149 = sbr.rel (%p147) target = $region24
      $region23: #{tpu_custom_call.1} parent=5 // pred_region
        // Predicated region
        $region25: #{tpu_custom_call.1} parent=23 // pred_check
          %p150 = pneg %p49
        $region26: #{tpu_custom_call.1} parent=23 // pred_check_branch
          %152 = sbr.rel (%p150) target = $region28
        $region27: #{tpu_custom_call.1} parent=23 // pred_region
          %s153 = sand.u32 %s39, 1
          %s154 = scalar_lea.sflag [#allocation3], %s153
          %s155 = sand.u32 %s39, 1
          %s156 = smul.addr %s155, 64
          %s157 = scalar_lea.vmem [#allocation2], %s156
          %s159 = ssub.s32 1024, 1024
          %160 = vsyncadd %s154, %s159
          %s161 = smul.addr %s22, 16
          %s162 = sadd.s32 %s23, %s161
          %s163 = smul.addr %s162, 128
          %s164 = scalar_lea.hbm %s0, %s163
          %s165 = sshll.u32 %s157, 4
          %s166 = int_to_ptr.vmem [resolvable:$true] %s165
          %171 = dma.hbm_to_vmem [thread:$0]  %s164, 1024, %s166, %s154, 256, 128, 8
        $region28: #{tpu_custom_call.1} parent=23 // pred_fallthru
          _
      $region24: #{tpu_custom_call.1} parent=5 // pred_fallthru
        _
      %p172 = scmp.le.s32.totalorder 1, %s15
      %p173 = scmp.lt.s32.totalorder %s15, 5
      %p174 = pnand %p172, %p173
      %p175 = pneg %p174
      // Predicated region
      $region29: #{tpu_custom_call.1} parent=5 // pred_check
        _
      $region30: #{tpu_custom_call.1} parent=5 // pred_check_branch
        %177 = sbr.rel (%p174) target = $region32
      $region31: #{tpu_custom_call.1} parent=5 // pred_region
        %s178 = ssub.s32 %s15, 1
        %s179 = sand.u32 %s42, 1
        %s180 = scalar_lea.sflag [#allocation3], %s179
        %s181 = sand.u32 %s42, 1
        %s182 = smul.addr %s181, 64
        %s183 = scalar_lea.vmem [#allocation2], %s182
        // Predicated region
        $region33: #{tpu_custom_call.1} parent=31 // pred_check
          %p184 = pneg %p55
        $region34: #{tpu_custom_call.1} parent=31 // pred_check_branch
          %186 = sbr.rel (%p184) target = $region36
        $region35: #{tpu_custom_call.1} parent=31 // pred_region
          %187 = dma.done %s180, 1024
        $region36: #{tpu_custom_call.1} parent=31 // pred_fallthru
          _
        %s188 = sand.u32 %s42, 1
        %s189 = scalar_lea.sflag [#allocation3], %s188
        %s190 = sand.u32 %s42, 1
        %s191 = smul.addr %s190, 64
        %s192 = scalar_lea.vmem [#allocation2], %s191
        %p193 = pneg %p55
        %p194 = pneg %p52
        %p195 = pneg %p76
        %p196 = pneg %p73
        %p197 = pneg %p97
        %p198 = pneg %p94
        %p199 = pneg %p125
        %p200 = pneg %p122
        %s201 = sand.u32 %s112, 1
        %s202 = scalar_lea.sflag [#allocation4], %s201
        %s203 = sand.u32 %s112, 1
        %s204 = smul.addr %s203, 4
        %s205 = scalar_lea.vmem [#allocation5], %s204
        %v207 = vld [vmem:[%s183] sm:$0xff]
        %v208 = vld [vmem:[%s183 + $0x8] sm:$0xff]
        %v209 = vld [vmem:[%s183 + $0x10] sm:$0xff]
        %v210 = vld [vmem:[%s183 + $0x18] sm:$0xff]
        %v211 = vld [vmem:[%s183 + $0x20] sm:$0xff]
        %v212 = vld [vmem:[%s183 + $0x28] sm:$0xff]
        %v213 = vld [vmem:[%s183 + $0x30] sm:$0xff]
        %v214 = vld [vmem:[%s183 + $0x38] sm:$0xff]
        %v215 = vpack.c.bf16 %v208, %v207
        %v216 = vpack.c.bf16 %v210, %v209
        %v217 = vpack.c.bf16 %v212, %v211
        %v218 = vpack.c.bf16 %v214, %v213
        %v219 = vld [vmem:[%s1] sm:$0xf]
        %v220 = vld [vmem:[%s2] sm:$0xff]
        %222 = vset.pattern.permute.xlu0 0
        %223 = vperm.xlu0 %222, %v220
        %v224 = vpop.permute.xlu0 %223
        %vm226 = vcmask 523264
        %v228 = vsel %vm226, %v219, 0
        %230 = vmatprep.subr.bf16.mxu0 0
        %231 = vmatpush1.bf16.msra.mxu0 %v215
        %232 = vmatprep.subr.bf16.mxu0 0
        %233 = vmatpush1.bf16.msra.mxu0 %v216
        %234 = vmatprep.subr.bf16.mxu0 0
        %235 = vmatpush1.bf16.msra.mxu0 %v217
        %236 = vmatprep.subr.bf16.mxu0 0
        %237 = vmatpush1.bf16.msra.mxu0 %v218
        %238 = vmatprep.subr.bf16.mxu0 0
        %239 = vmatpush1.bf16.msra.mxu0 0
        %240 = vmatprep.subr.bf16.mxu0 0
        %241 = vmatpush1.bf16.msra.mxu0 0
        %242 = vmatprep.subr.bf16.mxu0 0
        %243 = vmatpush1.bf16.msra.mxu0 0
        %244 = vmatprep.subr.bf16.mxu0 0
        %245 = vmatpush1.bf16.msra.mxu0 0
        %246 = vmatprep.subr.bf16.mxu0 0
        %247 = vmatpush1.bf16.msra.mxu0 0
        %248 = vmatprep.subr.bf16.mxu0 0
        %249 = vmatpush1.bf16.msra.mxu0 0
        %250 = vmatprep.subr.bf16.mxu0 0
        %251 = vmatpush1.bf16.msra.mxu0 0
        %252 = vmatprep.subr.bf16.mxu0 0
        %253 = vmatpush1.bf16.msra.mxu0 0
        %254 = vmatprep.subr.bf16.mxu0 0
        %255 = vmatpush1.bf16.msra.mxu0 0
        %256 = vmatprep.subr.bf16.mxu0 0
        %257 = vmatpush1.bf16.msra.mxu0 0
        %258 = vmatprep.subr.bf16.mxu0 0
        %259 = vmatpush1.bf16.msra.mxu0 0
        %260 = vmatprep.subr.bf16.mxu0 0
        %261 = vmatpush1.bf16.msra.mxu0 0
        %262 = vmatprep.mubr.bf16.mxu0 0
        %263 = vmatmul.mubr.bf16.gmra.mrb[0].mxu0 %v228
        %v264 = vpop.f32.mrb[0].mxu0
        %v265 = vadd.f32 %v224, %v264
        %v266 = vpop.f32.mrb[0].mxu0
        %v267 = vpop.f32.mrb[0].mxu0
        %v268 = vpop.f32.mrb[0].mxu0
        %269 = vdwg.mxu0
        %v270 = vpack.c.bf16 %v265, %v265
        %271 = vst [vmem:[%s205] sm:$0xf] %v270
        %s272 = sand.u32 %s112, 1
        %s273 = scalar_lea.sflag [#allocation4], %s272
        %s274 = sand.u32 %s112, 1
        %s275 = smul.addr %s274, 4
        %s276 = scalar_lea.vmem [#allocation5], %s275
        // Predicated region
        $region37: #{tpu_custom_call.1} parent=31 // pred_check
          %p277 = pneg %p122
        $region38: #{tpu_custom_call.1} parent=31 // pred_check_branch
          %279 = sbr.rel (%p277) target = $region40
        $region39: #{tpu_custom_call.1} parent=31 // pred_region
          %s281 = ssub.s32 64, 64
          %282 = vsyncadd %s273, %s281
          %s283 = smul.addr %s24, 2
          %s284 = sadd.s32 %s25, %s283
          %s285 = smul.addr %s284, 64
          %s286 = scalar_lea.hbm %s3, %s285
          %s288 = sshll.u32 %s276, 4
          %s289 = int_to_ptr.vmem [resolvable:$true] %s288
          %291 = dma.vmem_to_hbm [thread:$0]  %s289, 64, %s286, %s273
        $region40: #{tpu_custom_call.1} parent=31 // pred_fallthru
          _
      $region32: #{tpu_custom_call.1} parent=5 // pred_fallthru
        _
      %p292 = scmp.le.s32.totalorder 2, %s15
      // Predicated region
      $region41: #{tpu_custom_call.1} parent=5 // pred_check
        %p293 = pneg %p292
      $region42: #{tpu_custom_call.1} parent=5 // pred_check_branch
        %295 = sbr.rel (%p293) target = $region44
      $region43: #{tpu_custom_call.1} parent=5 // pred_region
        %s296 = ssub.s32 %s15, 2
        // Predicated region
        $region45: #{tpu_custom_call.1} parent=43 // pred_check
          %p297 = pneg %p128
        $region46: #{tpu_custom_call.1} parent=43 // pred_check_branch
          %299 = sbr.rel (%p297) target = $region48
        $region47: #{tpu_custom_call.1} parent=43 // pred_region
          %s300 = sand.u32 %s113, 1
          %s301 = scalar_lea.sflag [#allocation4], %s300
          %s302 = sand.u32 %s113, 1
          %s303 = smul.addr %s302, 4
          %s304 = scalar_lea.vmem [#allocation5], %s303
          %305 = dma.done %s301, 64
        $region48: #{tpu_custom_call.1} parent=43 // pred_fallthru
          _
      $region44: #{tpu_custom_call.1} parent=5 // pred_fallthru
        _
    $region6: #{tpu_custom_call.1} parent=1 // loop_footer
      %s19 = sadd.s32 1, %s15
    $region7: #{tpu_custom_call.1} parent=1 // loop_footer_branch
      %14 = sbr.rel target = $region3
    $region8: #{tpu_custom_call.1} parent=1 // loop_exit
      _
    %306 = vsyncpa [#allocation3], 1
    %s307 = scalar_lea.sflag [#allocation3], 1
    %308 = vsyncpa %s307, 1
    %309 = vsyncpa [#allocation4], 1
    %s310 = scalar_lea.sflag [#allocation4], 1
    %311 = vsyncpa %s310, 1

</llo_original>
